<compile_context>
chip_gen: v7x
topology: tpu7x:2x2x1
jax: 0.10.0
libtpu: 0.0.40
codegen_flags: <defaults>
</compile_context>

<pallas_src>
import functools

import jax
import jax.numpy as jnp
from jax.experimental import pallas as pl
from jax.experimental.pallas import tpu as pltpu

LANES = 128


# ---------------------------------------------------------------------------
# Kernel
# ---------------------------------------------------------------------------
def _sdf_volume_kernel(params_ref, pts_ref, deltas_ref, dens_ref,
                       feat_ref=None, *, rainbow: bool):
    # params (SMEM, f32[10]):
    #   [cx, cy, cz, radius, neg_inv_beta, alpha, half_alpha, f0, f1, f2]
    cx = params_ref[0]
    cy = params_ref[1]
    cz = params_ref[2]
    radius = params_ref[3]
    neg_inv_beta = params_ref[4]
    alpha = params_ref[5]
    half_alpha = params_ref[6]
    f0 = params_ref[7]
    f1 = params_ref[8]
    f2 = params_ref[9]

    dx = pts_ref[0] - cx          # (tr, 128) full vreg tiles
    dy = pts_ref[1] - cy
    dz = pts_ref[2] - cz

    # SphereSDF: ||p - c|| - r
    sd = jnp.sqrt(dx * dx + dy * dy + dz * dz) - radius

    # _sdf_to_density with one exp: exp(sd/beta) == exp(-|sd|/beta) for sd<=0,
    # and alpha folded into the constants (half_alpha = 0.5*alpha).
    e = jnp.exp(jnp.abs(sd) * neg_inv_beta)
    density = jnp.where(sd > 0.0, half_alpha * e, alpha - half_alpha * e)

    # out['density'] = -log(1 - density) / deltas
    # Exact divide (no approx reciprocal): the kernel is HBM-bound so the extra
    # EUP/VALU work is hidden, and it keeps density bit-accurate vs the reference.
    # (alpha >= 1 gives NaN/inf exactly like the PyTorch reference.)
    dens_ref[...] = -jnp.log1p(-density) / deltas_ref[...]

    # out['feature'] = clamp(|p - c|, .02, .98) * feature   (rainbow only)
    if rainbow:
        feat_ref[0] = jnp.clip(jnp.abs(dx), 0.02, 0.98) * f0
        feat_ref[1] = jnp.clip(jnp.abs(dy), 0.02, 0.98) * f1
        feat_ref[2] = jnp.clip(jnp.abs(dz), 0.02, 0.98) * f2


# ---------------------------------------------------------------------------
# Wrapper
# ---------------------------------------------------------------------------
def sdf_volume_forward(sample_points, sample_lengths, center, radius, alpha,
                       beta, feature, *, rainbow=True, block_rows=2048):
    """JAX/Pallas equivalent of SDFVolume.forward (sdf.type == 'sphere').

    sample_points : (n_rays, n_samples, 3) float32
    sample_lengths: (n_rays, n_samples, 1) float32
    Returns {'density': (N, 1), 'feature': (N, 3)} with N = n_rays * n_samples.
    """
    sample_points = sample_points.astype(jnp.float32)
    sample_lengths = sample_lengths.astype(jnp.float32)

    pts = sample_points.reshape(-1, 3)                       # (N, 3)
    n = pts.shape[0]

    depth = sample_lengths[..., 0]                           # (n_rays, n_samples)
    # n_samples << 128 here, so deltas are built host-side (diff+concat fuses);
    # in-kernel roll-based deltas would waste lanes.
    deltas = jnp.concatenate(
        [depth[..., 1:] - depth[..., :-1],
         1e10 * jnp.ones_like(depth[..., :1])], axis=-1).reshape(-1)   # (N,)

    # Re-layout N -> (rows, 128) lane-dense slabs; rows padded to a multiple of
    # the block row count tr (itself a multiple of 8 for (8,128) tiling).
    rows = pl.cdiv(n, LANES)
    tr = max(8, min(block_rows, pl.cdiv(rows, 8) * 8))
    tr = pl.cdiv(tr, 8) * 8
    # Guarantee >= 2 grid steps whenever there is enough data: v7x has 2
    # TensorCores per chip, and a 1-step grid would leave one idle.
    if rows > 8 and pl.cdiv(rows, tr) < 2:
        tr = max(8, pl.cdiv(pl.cdiv(rows, 2), 8) * 8)
    rows_pad = pl.cdiv(rows, tr) * tr
    n_pad = rows_pad * LANES

    pts_t = jnp.pad(pts.T, ((0, 0), (0, n_pad - n))
                    ).reshape(3, rows_pad, LANES)            # (3, R, 128)
    # Pad deltas with 1.0 (non-zero) so the padded tail stays finite.
    deltas_p = jnp.pad(deltas, (0, n_pad - n),
                       constant_values=1.0).reshape(rows_pad, LANES)  # (R, 128)

    # Scalars (SMEM). Pre-fold 0.5*alpha and -1/beta so the kernel only
    # multiplies/adds (trims ~3 VALU ops per element).
    center_f = jnp.reshape(jnp.asarray(center, jnp.float32), (3,))
    feature_f = jnp.reshape(jnp.asarray(feature, jnp.float32), (3,))
    alpha_f = jnp.reshape(jnp.asarray(alpha, jnp.float32), (1,))
    beta_f = jnp.asarray(beta, jnp.float32)
    params = jnp.concatenate([
        center_f,                                               # cx, cy, cz
        jnp.reshape(jnp.asarray(radius, jnp.float32), (1,)),    # radius
        jnp.reshape(-1.0 / beta_f, (1,)),                       # -1/beta
        alpha_f,                                                # alpha
        0.5 * alpha_f,                                          # 0.5*alpha
        feature_f,                                              # f0, f1, f2
    ])                                                          # (10,)

    grid = (rows_pad // tr,)
    kernel = functools.partial(_sdf_volume_kernel, rainbow=rainbow)

    if rainbow:
        out_shape = (jax.ShapeDtypeStruct((rows_pad, LANES), jnp.float32),
                     jax.ShapeDtypeStruct((3, rows_pad, LANES), jnp.float32))
        out_specs = (pl.BlockSpec((tr, LANES), lambda i: (i, 0)),
                     pl.BlockSpec((3, tr, LANES), lambda i: (0, i, 0)))
        n_bufs = 8
    else:
        out_shape = jax.ShapeDtypeStruct((rows_pad, LANES), jnp.float32)
        out_specs = pl.BlockSpec((tr, LANES), lambda i: (i, 0))
        n_bufs = 5

    # Explicit VMEM limit so the default scoped limit never constrains the tile
    # (double-buffered I/O = 2 * n_bufs * tr * 128 * 4B).  Cap below v7x's
    # 64 MiB physical VMEM.
    vmem_needed = 2 * n_bufs * tr * LANES * 4
    vmem_limit_bytes = int(min(max(32 << 20, vmem_needed + (8 << 20)), 48 << 20))

    outs = pl.pallas_call(
        kernel,
        out_shape=out_shape,
        grid=grid,
        in_specs=[
            pl.BlockSpec(memory_space=pltpu.MemorySpace.SMEM),       # params
            pl.BlockSpec((3, tr, LANES), lambda i: (0, i, 0)),       # points
            pl.BlockSpec((tr, LANES), lambda i: (i, 0)),             # deltas
        ],
        out_specs=out_specs,
        compiler_params=pltpu.CompilerParams(
            dimension_semantics=("parallel",),
            vmem_limit_bytes=vmem_limit_bytes,
            # Let XLA fuse the transpose/pad producers into the Pallas operands
            # instead of materializing the slabs in HBM (params stays unfused).
            allow_input_fusion=[False, True, True],
        ),
    )(params, pts_t, deltas_p)

    if rainbow:
        dens_t, feat_t = outs
        feature_out = feat_t.reshape(3, -1)[:, :n].T             # (N, 3)
    else:
        dens_t = outs
        # feature is a per-lane constant on the non-rainbow path: no kernel
        # stores, no transpose-back.
        feature_out = jnp.broadcast_to(feature_f[None, :], (n, 3))

    density = dens_t.reshape(-1)[:n][:, None]                    # (N, 1)
    # TODO(synk): downstream consumers expecting row-major (N,1)/(N,3) force an
    # un-pad/transpose pass here; callers that can consume the (R,128)/(3,R,128)
    # slab layout (or bf16 features) should take dens_t/feat_t directly.
    return {"density": density, "feature": feature_out}


# ---------------------------------------------------------------------------
# Pure-JAX reference (mirrors the PyTorch code) for a sanity check.
# ---------------------------------------------------------------------------
def _reference(sample_points, sample_lengths, center, radius, alpha, beta,
               feature, rainbow):
    pts = sample_points.reshape(-1, 3)
    depth = sample_lengths[..., 0]
    deltas = jnp.concatenate(
        [depth[..., 1:] - depth[..., :-1],
         1e10 * jnp.ones_like(depth[..., :1])], axis=-1).reshape(-1, 1)
    sd = jnp.linalg.norm(pts - center[None, :], axis=-1, keepdims=True) - radius
    density = jnp.where(sd > 0, 0.5 * jnp.exp(-sd / beta),
                        1.0 - 0.5 * jnp.exp(sd / beta)) * alpha
    if rainbow:
        base_color = jnp.clip(jnp.abs(pts - center[None, :]), 0.02, 0.98)
    else:
        base_color = 1.0
    return {
        "density": -jnp.log(1.0 - density) / deltas,
        "feature": base_color * feature[None, :] * jnp.ones((pts.shape[0], 1)),
    }


def _check(out, ref, n):
    assert out["density"].shape == (n, 1)
    assert out["feature"].shape == (n, 3)
    assert jnp.allclose(out["density"], ref["density"], rtol=2e-3, atol=1e-5)
    assert jnp.allclose(out["feature"], ref["feature"], rtol=1e-5, atol=1e-6)


if __name__ == "__main__":
    key = jax.random.PRNGKey(0)
    k_pts, k_len, k_pts2, k_len2 = jax.random.split(key, 4)

    # Deterministic "cfg" parameters (SphereSDF).
    center = jnp.array([0.0, 0.0, 0.0], jnp.float32)          # cfg.sdf.center.val
    radius = jnp.float32(1.0)                                  # cfg.sdf.radius.val
    alpha = jnp.float32(0.9)                                   # cfg.alpha.val
    beta = jnp.float32(0.05)                                   # cfg.beta.val
    # self.feature = ones_like(cfg.feature.val) -> always ones, shape (1, 3)
    feature = jnp.ones((3,), jnp.float32)

    # --- case 1: small, single grid step (N = 128), rainbow ---
    n_rays, n_samples = 8, 16
    sample_points = jax.random.normal(k_pts, (n_rays, n_samples, 3),
                                      dtype=jnp.float32) * 1.5
    base_depth = jnp.linspace(0.5, 4.0, n_samples, dtype=jnp.float32)
    jitter = 0.01 * jax.random.uniform(k_len, (n_rays, n_samples),
                                       dtype=jnp.float32)
    sample_lengths = (base_depth[None, :] + jitter)[..., None]

    out = sdf_volume_forward(sample_points, sample_lengths, center, radius,
                             alpha, beta, feature, rainbow=True)
    jax.block_until_ready(out)
    ref = _reference(sample_points, sample_lengths, center, radius, alpha,
                     beta, feature, True)
    _check(out, ref, n_rays * n_samples)

    # --- case 2: multiple grid steps + row padding (N = 1280, block_rows=8) ---
    n_rays2, n_samples2 = 40, 32
    sample_points2 = jax.random.normal(k_pts2, (n_rays2, n_samples2, 3),
                                       dtype=jnp.float32) * 1.5
    base_depth2 = jnp.linspace(0.5, 4.0, n_samples2, dtype=jnp.float32)
    jitter2 = 0.01 * jax.random.uniform(k_len2, (n_rays2, n_samples2),
                                        dtype=jnp.float32)
    sample_lengths2 = (base_depth2[None, :] + jitter2)[..., None]

    out2 = sdf_volume_forward(sample_points2, sample_lengths2, center, radius,
                              alpha, beta, feature, rainbow=True,
                              block_rows=8)
    jax.block_until_ready(out2)
    ref2 = _reference(sample_points2, sample_lengths2, center, radius, alpha,
                      beta, feature, True)
    _check(out2, ref2, n_rays2 * n_samples2)

    # --- case 3: rainbow=False path (feature emitted outside the kernel) ---
    out3 = sdf_volume_forward(sample_points, sample_lengths, center, radius,
                              alpha, beta, feature, rainbow=False)
    jax.block_until_ready(out3)
    ref3 = _reference(sample_points, sample_lengths, center, radius, alpha,
                      beta, feature, False)
    _check(out3, ref3, n_rays * n_samples)

    print("KERNEL_OK")
</pallas_src>

<mosaic_0001>
module attributes {stable_mosaic.version = 11 : i64} {
  func.func @_sdf_volume_kernel(%arg0: i32, %arg1: memref<10xf32, #tpu.memory_space<smem>>, %arg2: memref<3x8x128xf32, #tpu.memory_space<vmem>>, %arg3: memref<8x128xf32, #tpu.memory_space<vmem>>, %arg4: memref<8x128xf32, #tpu.memory_space<vmem>>, %arg5: memref<3x8x128xf32, #tpu.memory_space<vmem>>) attributes {dimension_semantics = [#tpu.dimension_semantics<parallel>], iteration_bounds = array<i64: 1>, scalar_prefetch = 0 : i64, scratch_operands = 0 : i64, tpu.core_type = #tpu.core_type<tc>, window_params = [{transform_indices = @transform_0, window_bounds = array<i64: 10>}, {transform_indices = @transform_1, window_bounds = array<i64: 3, 8, 128>}, {transform_indices = @transform_2, window_bounds = array<i64: 8, 128>}, {transform_indices = @transform_3, window_bounds = array<i64: 8, 128>}, {transform_indices = @transform_4, window_bounds = array<i64: 3, 8, 128>}]} {
    %c0 = arith.constant 0 : index
    %0 = memref.load %arg1[%c0] : memref<10xf32, #tpu.memory_space<smem>>
    %c1 = arith.constant 1 : index
    %1 = memref.load %arg1[%c1] : memref<10xf32, #tpu.memory_space<smem>>
    %c2 = arith.constant 2 : index
    %2 = memref.load %arg1[%c2] : memref<10xf32, #tpu.memory_space<smem>>
    %c3 = arith.constant 3 : index
    %3 = memref.load %arg1[%c3] : memref<10xf32, #tpu.memory_space<smem>>
    %c4 = arith.constant 4 : index
    %4 = memref.load %arg1[%c4] : memref<10xf32, #tpu.memory_space<smem>>
    %c5 = arith.constant 5 : index
    %5 = memref.load %arg1[%c5] : memref<10xf32, #tpu.memory_space<smem>>
    %c6 = arith.constant 6 : index
    %6 = memref.load %arg1[%c6] : memref<10xf32, #tpu.memory_space<smem>>
    %c7 = arith.constant 7 : index
    %7 = memref.load %arg1[%c7] : memref<10xf32, #tpu.memory_space<smem>>
    %c8 = arith.constant 8 : index
    %8 = memref.load %arg1[%c8] : memref<10xf32, #tpu.memory_space<smem>>
    %c9 = arith.constant 9 : index
    %9 = memref.load %arg1[%c9] : memref<10xf32, #tpu.memory_space<smem>>
    %c0_0 = arith.constant 0 : index
    %c0_1 = arith.constant 0 : index
    %c0_2 = arith.constant 0 : index
    %10 = vector.load %arg2[%c0_0, %c0_1, %c0_2] : memref<3x8x128xf32, #tpu.memory_space<vmem>>, vector<1x8x128xf32>
    %11 = vector.shape_cast %10 : vector<1x8x128xf32> to vector<8x128xf32>
    %12 = vector.broadcast %0 : f32 to vector<8x128xf32>
    %13 = arith.subf %11, %12 : vector<8x128xf32>
    %c1_3 = arith.constant 1 : index
    %c0_4 = arith.constant 0 : index
    %c0_5 = arith.constant 0 : index
    %14 = vector.load %arg2[%c1_3, %c0_4, %c0_5] : memref<3x8x128xf32, #tpu.memory_space<vmem>>, vector<1x8x128xf32>
    %15 = vector.shape_cast %14 : vector<1x8x128xf32> to vector<8x128xf32>
    %16 = vector.broadcast %1 : f32 to vector<8x128xf32>
    %17 = arith.subf %15, %16 : vector<8x128xf32>
    %c2_6 = arith.constant 2 : index
    %c0_7 = arith.constant 0 : index
    %c0_8 = arith.constant 0 : index
    %18 = vector.load %arg2[%c2_6, %c0_7, %c0_8] : memref<3x8x128xf32, #tpu.memory_space<vmem>>, vector<1x8x128xf32>
    %19 = vector.shape_cast %18 : vector<1x8x128xf32> to vector<8x128xf32>
    %20 = vector.broadcast %2 : f32 to vector<8x128xf32>
    %21 = arith.subf %19, %20 : vector<8x128xf32>
    %22 = arith.mulf %13, %13 : vector<8x128xf32>
    %23 = arith.mulf %17, %17 : vector<8x128xf32>
    %24 = arith.addf %22, %23 : vector<8x128xf32>
    %25 = arith.mulf %21, %21 : vector<8x128xf32>
    %26 = arith.addf %24, %25 : vector<8x128xf32>
    %27 = math.sqrt %26 : vector<8x128xf32>
    %28 = vector.broadcast %3 : f32 to vector<8x128xf32>
    %29 = arith.subf %27, %28 : vector<8x128xf32>
    %30 = math.absf %29 : vector<8x128xf32>
    %31 = vector.broadcast %4 : f32 to vector<8x128xf32>
    %32 = arith.mulf %30, %31 : vector<8x128xf32>
    %33 = math.exp %32 : vector<8x128xf32>
    %cst = arith.constant 0.000000e+00 : f32
    %34 = vector.broadcast %cst : f32 to vector<8x128xf32>
    %35 = arith.cmpf ogt, %29, %34 : vector<8x128xf32>
    %36 = vector.broadcast %6 : f32 to vector<8x128xf32>
    %37 = arith.mulf %36, %33 : vector<8x128xf32>
    %38 = vector.broadcast %6 : f32 to vector<8x128xf32>
    %39 = arith.mulf %38, %33 : vector<8x128xf32>
    %40 = vector.broadcast %5 : f32 to vector<8x128xf32>
    %41 = arith.subf %40, %39 : vector<8x128xf32>
    %42 = arith.select %35, %37, %41 : vector<8x128xi1>, vector<8x128xf32>
    %cst_9 = arith.constant 0.000000e+00 : f32
    %43 = vector.broadcast %cst_9 : f32 to vector<8x128xf32>
    %44 = arith.subf %43, %42 : vector<8x128xf32>
    %45 = math.log1p %44 : vector<8x128xf32>
    %cst_10 = arith.constant 0.000000e+00 : f32
    %46 = vector.broadcast %cst_10 : f32 to vector<8x128xf32>
    %47 = arith.subf %46, %45 : vector<8x128xf32>
    %c0_11 = arith.constant 0 : index
    %c0_12 = arith.constant 0 : index
    %48 = vector.load %arg3[%c0_11, %c0_12] : memref<8x128xf32, #tpu.memory_space<vmem>>, vector<8x128xf32>
    %49 = arith.divf %47, %48 : vector<8x128xf32>
    %c0_13 = arith.constant 0 : index
    %c0_14 = arith.constant 0 : index
    %50 = vector.load %arg4[%c0_13, %c0_14] : memref<8x128xf32, #tpu.memory_space<vmem>>, vector<8x128xf32>
    tpu.vector_store %arg4[%c0_13, %c0_14], %49 {strides = array<i32>} : memref<8x128xf32, #tpu.memory_space<vmem>>, vector<8x128xf32>,
    %51 = math.absf %13 : vector<8x128xf32>
    %cst_15 = arith.constant 2.000000e-02 : f32
    %cst_16 = arith.constant 9.800000e-01 : f32
    %52 = vector.broadcast %cst_15 : f32 to vector<8x128xf32>
    %53 = arith.maximumf %52, %51 : vector<8x128xf32>
    %54 = vector.broadcast %cst_16 : f32 to vector<8x128xf32>
    %55 = arith.minimumf %54, %53 : vector<8x128xf32>
    %56 = vector.broadcast %7 : f32 to vector<8x128xf32>
    %57 = arith.mulf %55, %56 : vector<8x128xf32>
    %c0_17 = arith.constant 0 : index
    %c0_18 = arith.constant 0 : index
    %c0_19 = arith.constant 0 : index
    %58 = vector.load %arg5[%c0_17, %c0_18, %c0_19] : memref<3x8x128xf32, #tpu.memory_space<vmem>>, vector<1x8x128xf32>
    %59 = vector.shape_cast %58 : vector<1x8x128xf32> to vector<8x128xf32>
    %60 = vector.shape_cast %57 : vector<8x128xf32> to vector<1x8x128xf32>
    tpu.vector_store %arg5[%c0_17, %c0_18, %c0_19], %60 {strides = array<i32>} : memref<3x8x128xf32, #tpu.memory_space<vmem>>, vector<1x8x128xf32>,
    %61 = math.absf %17 : vector<8x128xf32>
    %cst_20 = arith.constant 2.000000e-02 : f32
    %cst_21 = arith.constant 9.800000e-01 : f32
    %62 = vector.broadcast %cst_20 : f32 to vector<8x128xf32>
    %63 = arith.maximumf %62, %61 : vector<8x128xf32>
    %64 = vector.broadcast %cst_21 : f32 to vector<8x128xf32>
    %65 = arith.minimumf %64, %63 : vector<8x128xf32>
    %66 = vector.broadcast %8 : f32 to vector<8x128xf32>
    %67 = arith.mulf %65, %66 : vector<8x128xf32>
    %c1_22 = arith.constant 1 : index
    %c0_23 = arith.constant 0 : index
    %c0_24 = arith.constant 0 : index
    %68 = vector.load %arg5[%c1_22, %c0_23, %c0_24] : memref<3x8x128xf32, #tpu.memory_space<vmem>>, vector<1x8x128xf32>
    %69 = vector.shape_cast %68 : vector<1x8x128xf32> to vector<8x128xf32>
    %70 = vector.shape_cast %67 : vector<8x128xf32> to vector<1x8x128xf32>
    tpu.vector_store %arg5[%c1_22, %c0_23, %c0_24], %70 {strides = array<i32>} : memref<3x8x128xf32, #tpu.memory_space<vmem>>, vector<1x8x128xf32>,
    %71 = math.absf %21 : vector<8x128xf32>
    %cst_25 = arith.constant 2.000000e-02 : f32
    %cst_26 = arith.constant 9.800000e-01 : f32
    %72 = vector.broadcast %cst_25 : f32 to vector<8x128xf32>
    %73 = arith.maximumf %72, %71 : vector<8x128xf32>
    %74 = vector.broadcast %cst_26 : f32 to vector<8x128xf32>
    %75 = arith.minimumf %74, %73 : vector<8x128xf32>
    %76 = vector.broadcast %9 : f32 to vector<8x128xf32>
    %77 = arith.mulf %75, %76 : vector<8x128xf32>
    %c2_27 = arith.constant 2 : index
    %c0_28 = arith.constant 0 : index
    %c0_29 = arith.constant 0 : index
    %78 = vector.load %arg5[%c2_27, %c0_28, %c0_29] : memref<3x8x128xf32, #tpu.memory_space<vmem>>, vector<1x8x128xf32>
    %79 = vector.shape_cast %78 : vector<1x8x128xf32> to vector<8x128xf32>
    %80 = vector.shape_cast %77 : vector<8x128xf32> to vector<1x8x128xf32>
    tpu.vector_store %arg5[%c2_27, %c0_28, %c0_29], %80 {strides = array<i32>} : memref<3x8x128xf32, #tpu.memory_space<vmem>>, vector<1x8x128xf32>,
    return
  }
  func.func @transform_0(%arg0: i32) -> i32 {
    %c0_i32 = arith.constant 0 : i32
    %c0_i32_0 = arith.constant 0 : i32
    return %c0_i32 : i32
  }
  func.func @transform_1(%arg0: i32) -> (i32, i32, i32) {
    %c0_i32 = arith.constant 0 : i32
    %c0_i32_0 = arith.constant 0 : i32
    %c0_i32_1 = arith.constant 0 : i32
    return %c0_i32, %arg0, %c0_i32_0 : i32, i32, i32
  }
  func.func @transform_2(%arg0: i32) -> (i32, i32) {
    %c0_i32 = arith.constant 0 : i32
    %c0_i32_0 = arith.constant 0 : i32
    return %arg0, %c0_i32 : i32, i32
  }
  func.func @transform_3(%arg0: i32) -> (i32, i32) {
    %c0_i32 = arith.constant 0 : i32
    %c0_i32_0 = arith.constant 0 : i32
    return %arg0, %c0_i32 : i32, i32
  }
  func.func @transform_4(%arg0: i32) -> (i32, i32, i32) {
    %c0_i32 = arith.constant 0 : i32
    %c0_i32_0 = arith.constant 0 : i32
    %c0_i32_1 = arith.constant 0 : i32
    return %c0_i32, %arg0, %c0_i32_0 : i32, i32, i32
  }
}

</mosaic_0001>

<llo_original>
// kernel: tpu_custom_call.1
$region0: #{tpu_custom_call.1}
  #allocation0 [shape = 'u32[]', space=smem, size = 0x4, offset = 0x4, fixed_abs, tag = 'smem constant byte address 0x4 - core index']
  #allocation1 [shape = 'u32[144,128]{1,0:T(1,128)}', space=vmem, size = 0x12000, scoped, tag = 'internal scratch']
  %s0 = inlined_call_operand.hbm [shape: f32[10], index: 0, kind: input, shape index: {}]
  %s1 = inlined_call_operand.hbm [shape: f32[3,8,128], index: 1, kind: input, shape index: {}]
  %s2 = inlined_call_operand.hbm [shape: f32[8,128], index: 2, kind: input, shape index: {}]
  %s3 = inlined_call_operand.hbm [shape: f32[8,128], index: 3, kind: output, shape index: {0}]
  %s4 = inlined_call_operand.hbm [shape: f32[3,8,128], index: 4, kind: output, shape index: {1}]
  %5 = xla_tuple %s3, %s4
  %s6 = sld [smem:[#allocation0]]
  $region42: #{tpu_custom_call.1} parent=0
    _
  %s8 = ssub.s32 1, %s6
  %s9 = scalar_select 0, %s8, %s6
  $region1: #{tpu_custom_call.1} parent=0
    #allocation2 [shape = 'u8[512]{0}', space=smem, size = 0x200, scoped, tag = 'input window, operand 0, single buffered']
    #allocation3 [shape = 's32[1]{0}', space=sflag, size = 0x4, scoped, tag = 'scoped memory for tpu_custom_call.1']
    #allocation4 [shape = 's32[1]{0}', space=sflag, size = 0x4, scoped, tag = 'scoped memory for tpu_custom_call.1']
    #allocation5 [shape = 's32[1]{0}', space=sflag, size = 0x4, scoped, tag = 'scoped memory for tpu_custom_call.1']
    #allocation6 [shape = 'u8[12288]{0}', space=vmem, size = 0x3000, scoped, tag = 'input window, operand 1, single buffered']
    #allocation7 [shape = 'u8[4096]{0}', space=vmem, size = 0x1000, scoped, tag = 'input window, operand 2, single buffered']
    #allocation8 [shape = 's32[1]{0}', space=sflag, size = 0x4, scoped, tag = 'scoped memory for tpu_custom_call.1']
    #allocation9 [shape = 'u8[4096]{0}', space=vmem, size = 0x1000, scoped, tag = 'output window, operand 0, single buffered']
    #allocation10 [shape = 'u8[12288]{0}', space=vmem, size = 0x3000, scoped, tag = 'output window, operand 1, single buffered']
    #allocation11 [shape = 's32[1]{0}', space=sflag, size = 0x4, scoped, tag = 'scoped memory for tpu_custom_call.1']
    %10 = vsyncpa [#allocation5], 0
    %11 = vsyncpa [#allocation3], 0
    %12 = vsyncpa [#allocation8], 0
    %13 = vsyncpa [#allocation4], 0
    %14 = vsyncpa [#allocation11], 0
    // Predicated region
    $region2: #{tpu_custom_call.1} parent=1 // pred_check
      _
    $region3: #{tpu_custom_call.1} parent=1 // pred_check_branch
      %16 = sbr.rel (0) target = $region5
    $region4: #{tpu_custom_call.1} parent=1 // pred_region
      %s18 = ssub.s32 16, 16
      %19 = vsyncadd [#allocation5], %s18
      %22 = dma.hbm_to_smem %s0, 16, [#allocation2], [#allocation5]
    $region5: #{tpu_custom_call.1} parent=1 // pred_fallthru
      _
    // Predicated region
    $region6: #{tpu_custom_call.1} parent=1 // pred_check
      _
    $region7: #{tpu_custom_call.1} parent=1 // pred_check_branch
      %24 = sbr.rel (0) target = $region9
    $region8: #{tpu_custom_call.1} parent=1 // pred_region
      %s26 = ssub.s32 384, 384
      %27 = vsyncadd [#allocation3], %s26
      %s28 = sshll.u32 [#allocation6], 4
      %s29 = int_to_ptr.vmem [resolvable:$true] %s28
      %34 = dma.hbm_to_vmem [thread:$0]  %s1, 384, %s29, [#allocation3], 128, 128, 8
    $region9: #{tpu_custom_call.1} parent=1 // pred_fallthru
      _
    // Predicated region
    $region10: #{tpu_custom_call.1} parent=1 // pred_check
      _
    $region11: #{tpu_custom_call.1} parent=1 // pred_check_branch
      %36 = sbr.rel (0) target = $region13
    $region12: #{tpu_custom_call.1} parent=1 // pred_region
      %s38 = ssub.s32 128, 128
      %39 = vsyncadd [#allocation8], %s38
      %s41 = sshll.u32 [#allocation7], 4
      %s42 = int_to_ptr.vmem [resolvable:$true] %s41
      %44 = dma.hbm_to_vmem [thread:$0]  %s2, 128, %s42, [#allocation8]
    $region13: #{tpu_custom_call.1} parent=1 // pred_fallthru
      _
    // Predicated region
    $region14: #{tpu_custom_call.1} parent=1 // pred_check
      _
    $region15: #{tpu_custom_call.1} parent=1 // pred_check_branch
      %46 = sbr.rel (0) target = $region17
    $region16: #{tpu_custom_call.1} parent=1 // pred_region
      %47 = dma.done [#allocation5], 16
    $region17: #{tpu_custom_call.1} parent=1 // pred_fallthru
      _
    // Predicated region
    $region18: #{tpu_custom_call.1} parent=1 // pred_check
      _
    $region19: #{tpu_custom_call.1} parent=1 // pred_check_branch
      %49 = sbr.rel (0) target = $region21
    $region20: #{tpu_custom_call.1} parent=1 // pred_region
      %50 = dma.done [#allocation3], 384
    $region21: #{tpu_custom_call.1} parent=1 // pred_fallthru
      _
    // Predicated region
    $region22: #{tpu_custom_call.1} parent=1 // pred_check
      _
    $region23: #{tpu_custom_call.1} parent=1 // pred_check_branch
      %52 = sbr.rel (0) target = $region25
    $region24: #{tpu_custom_call.1} parent=1 // pred_region
      %53 = dma.done [#allocation8], 128
    $region25: #{tpu_custom_call.1} parent=1 // pred_fallthru
      _
    %54 = sfence
    %s55 = sld [smem:[#allocation2]]
    %s56 = sld [smem:[#allocation2 + $0x1]]
    %s57 = sld [smem:[#allocation2 + $0x2]]
    %s58 = sld [smem:[#allocation2 + $0x3]]
    %s59 = sld [smem:[#allocation2 + $0x4]]
    %s60 = sld [smem:[#allocation2 + $0x5]]
    %s61 = sld [smem:[#allocation2 + $0x6]]
    %s62 = sld [smem:[#allocation2 + $0x7]]
    %s63 = sld [smem:[#allocation2 + $0x8]]
    %s64 = sld [smem:[#allocation2 + $0x9]]
    %v65 = vld [vmem:[#allocation6] sm:$0xff]
    %v66 = vstv %s55
    %v67 = vsub.f32 %v65, %v66
    %s68 = scalar_lea.vmem [#allocation6], 8
    %v69 = vld [vmem:[%s68] sm:$0xff]
    %v70 = vstv %s56
    %v71 = vsub.f32 %v69, %v70
    %s72 = scalar_lea.vmem [#allocation6], 16
    %v73 = vld [vmem:[%s72] sm:$0xff]
    %v74 = vstv %s57
    %v75 = vsub.f32 %v73, %v74
    %v76 = vmul.f32 %v67, %v67
    %v77 = vmul.f32 %v71, %v71
    %v78 = vadd.f32 %v76, %v77
    %v79 = vmul.f32 %v75, %v75
    %v80 = vadd.f32 %v78, %v79
    %v81 = vrsqrt.pop %v80
    %v82 = vmul.f32 %v80, %v81
    %vm83 = vcmp.eq.f32.partialorder %v80, inf
    %v84 = vsel %vm83, %v80, %v82
    %vm85 = vcmp.eq.f32.partialorder %v80, 0.0
    %v86 = vand.u32 %v80, 2147483648
    %v87 = vsel %vm85, %v86, %v84
    %v88 = vstv %s58
    %v89 = vsub.f32 %v87, %v88
    %v90 = vand.u32 2147483647, %v89
    %v91 = vstv %s59
    %v92 = vmul.f32 %v90, %v91
    %v93 = vmul.f32 %v92, 1.442695
    %v94 = vpow.pop %v93
    %vm95 = vcmp.gt.f32.partialorder %v89, 0.0
    %v96 = vstv %s61
    %v97 = vmul.f32 %v96, %v94
    %v98 = vstv %s60
    %v99 = vsub.f32 %v98, %v97
    %v100 = vsel %vm95, %v97, %v99
    %v101 = vsub.f32 0.0, %v100
    %v102 = vadd.f32 %v101, 1.0
    %v103 = vlog2.pop %v102
    %v104 = vmul.f32 %v103, 0.6931472
    %v105 = vmul.f32 -0.5, %v101
    %v106 = vadd.f32 %v105, 1.0
    %v107 = vmul.f32 %v106, %v101
    %v108 = vand.u32 2147483647, %v101
    %vm109 = vcmp.lt.f32.partialorder %v108, 0.0004427343
    %v110 = vsel %vm109, %v107, %v104
    %v111 = vsub.f32 0.0, %v110
    %v112 = vld [vmem:[#allocation7] sm:$0xff]
    %v113 = vrcp.pop %v112
    %v114 = vmul.f32 %v111, %v113
    %115 = vst [vmem:[#allocation9] sm:$0xff] %v114
    %v116 = vand.u32 2147483647, %v67
    %v117 = vmax.f32 %v116, 0.02
    %v118 = vmin.f32 %v117, 0.98
    %v119 = vstv %s62
    %v120 = vmul.f32 %v118, %v119
    %121 = vst [vmem:[#allocation10] sm:$0xff] %v120
    %v122 = vand.u32 2147483647, %v71
    %v123 = vmax.f32 %v122, 0.02
    %v124 = vmin.f32 %v123, 0.98
    %v125 = vstv %s63
    %v126 = vmul.f32 %v124, %v125
    %s127 = scalar_lea.vmem [#allocation10], 8
    %128 = vst [vmem:[%s127] sm:$0xff] %v126
    %v129 = vand.u32 2147483647, %v75
    %v130 = vmax.f32 %v129, 0.02
    %v131 = vmin.f32 %v130, 0.98
    %v132 = vstv %s64
    %v133 = vmul.f32 %v131, %v132
    %s134 = scalar_lea.vmem [#allocation10], 16
    %135 = vst [vmem:[%s134] sm:$0xff] %v133
    // Predicated region
    $region26: #{tpu_custom_call.1} parent=1 // pred_check
      _
    $region27: #{tpu_custom_call.1} parent=1 // pred_check_branch
      %137 = sbr.rel (0) target = $region29
    $region28: #{tpu_custom_call.1} parent=1 // pred_region
      %s139 = ssub.s32 128, 128
      %140 = vsyncadd [#allocation4], %s139
      %s142 = sshll.u32 [#allocation9], 4
      %s143 = int_to_ptr.vmem [resolvable:$true] %s142
      %145 = dma.vmem_to_hbm [thread:$0]  %s143, 128, %s3, [#allocation4]
    $region29: #{tpu_custom_call.1} parent=1 // pred_fallthru
      _
    // Predicated region
    $region30: #{tpu_custom_call.1} parent=1 // pred_check
      _
    $region31: #{tpu_custom_call.1} parent=1 // pred_check_branch
      %147 = sbr.rel (0) target = $region33
    $region32: #{tpu_custom_call.1} parent=1 // pred_region
      %s149 = ssub.s32 384, 384
      %150 = vsyncadd [#allocation11], %s149
      %s151 = sshll.u32 [#allocation10], 4
      %s152 = int_to_ptr.vmem [resolvable:$true] %s151
      %157 = dma.vmem_to_hbm [thread:$0]  %s152, 384, %s4, [#allocation11], 128, 128, 8
    $region33: #{tpu_custom_call.1} parent=1 // pred_fallthru
      _
    // Predicated region
    $region34: #{tpu_custom_call.1} parent=1 // pred_check
      _
    $region35: #{tpu_custom_call.1} parent=1 // pred_check_branch
      %159 = sbr.rel (0) target = $region37
    $region36: #{tpu_custom_call.1} parent=1 // pred_region
      %160 = dma.done [#allocation4], 128
    $region37: #{tpu_custom_call.1} parent=1 // pred_fallthru
      _
    // Predicated region
    $region38: #{tpu_custom_call.1} parent=1 // pred_check
      _
    $region39: #{tpu_custom_call.1} parent=1 // pred_check_branch
      %162 = sbr.rel (0) target = $region41
    $region40: #{tpu_custom_call.1} parent=1 // pred_region
      %163 = dma.done [#allocation11], 384
    $region41: #{tpu_custom_call.1} parent=1 // pred_fallthru
      _
    %164 = vsyncpa [#allocation3], 1
    %165 = vsyncpa [#allocation8], 1
    %166 = vsyncpa [#allocation4], 1
    %167 = vsyncpa [#allocation11], 1
    %168 = vsyncpa [#allocation5], 1

</llo_original>
